<compile_context>
chip_gen: v7x
topology: tpu7x:2x2x1
jax: 0.10.0
libtpu: 0.0.40
codegen_flags: <defaults>
</compile_context>

<pallas_src>
import functools
import math

import jax
import jax.numpy as jnp
from jax.experimental import pallas as pl
from jax.experimental.pallas import tpu as pltpu


def _int_power(x, n):
    """x**n for a static int n >= 1, via exponentiation-by-squaring (unrolled)."""
    acc = None
    base = x
    while n > 0:
        if n & 1:
            acc = base if acc is None else acc * base
        n >>= 1
        if n > 0:
            base = base * base
    return acc


def _bessel_kernel(dist_ref, freq_ref, expand_ref, out_ref, *, inv_cutoff, p, a, b, c):
    # dist_ref:   (block_pr, group)       `group` consecutive distances per packed row
    # freq_ref:   (1, lane_width)         freq tiled `group` times along lanes
    # expand_ref: (group, lane_width)     0/1 replication matrix (exact)
    # out_ref:    (block_pr, lane_width)  lane-dense packed output
    xg = dist_ref[...].astype(jnp.float32) * inv_cutoff            # (R, group)
    # Replicate each distance across its num_radial lanes using the idle MXU.
    x = jnp.dot(xg, expand_ref[...], preferred_element_type=jnp.float32)  # (R, L)

    # Envelope: 1/x + a*x^p + b*x^(p+1) + c*x^(p+2), zeroed where x >= 1.
    inv_x = pl.reciprocal(x, approx=True)                          # EUP seed
    inv_x = inv_x * (2.0 - x * inv_x)                              # Newton step -> f32 acc.
    x_p = _int_power(x, p)
    x_p1 = x_p * x
    env = inv_x + a * x_p + b * x_p1 + c * x_p1 * x
    env = jnp.where(x < 1.0, env, 0.0)

    # TODO(synk): for the default init freq[k] = (k+1)*pi the K sin() evaluations could
    # be replaced by the 2*cos(pi*x) Chebyshev recurrence; kept general since freq is a
    # learnable parameter of the layer.
    out = env * jnp.sin(freq_ref[...].astype(jnp.float32) * x)
    out_ref[...] = out.astype(out_ref.dtype)


def _pick_block_rows(packed_rows, lane_width):
    """Packed-row tile size from the PADDED VMEM footprint (lane dim padded to 128)."""
    padded_lanes = ((max(lane_width, 1) + 127) // 128) * 128
    # dist tile (padded to 128 lanes) + output tile, both double-buffered, f32.
    bytes_per_row = (128 + padded_lanes) * 4 * 2
    budget = 8 * 1024 * 1024  # safe under scoped VMEM defaults on v5e/v6e/v7x
    max_block = max(8, (budget // bytes_per_row) // 8 * 8)
    block = min(max_block, packed_rows)
    # Ensure >= 2 grid steps when there is enough work (lets v7x use both TensorCores).
    if packed_rows > 16:
        half = (((packed_rows + 1) // 2) + 7) // 8 * 8
        block = min(block, half)
    if block < packed_rows:
        block = max(8, (block // 8) * 8)
    return block


def bessel_basis_pallas(dist, freq, *, cutoff, envelope_exponent=6):
    """Pallas TPU BesselBasisLayer forward.  Returns dist.shape + (num_radial,)."""
    orig_shape = dist.shape
    num_radial = int(freq.shape[-1])
    out_dtype = jnp.promote_types(dist.dtype, freq.dtype)

    rows = int(dist.size)
    # Pack `group` edges per output row so the last dim is (close to) 128 lanes.
    group = max(1, 128 // num_radial) if num_radial <= 128 else 1
    lane_width = group * num_radial

    packed_rows = pl.cdiv(rows, group)
    padded_rows = packed_rows * group

    dist_flat = dist.reshape(rows).astype(jnp.float32)
    if padded_rows != rows:
        # Pad with `cutoff` so padded entries hit the x >= 1 envelope cut (clean zeros).
        pad = jnp.full((padded_rows - rows,), float(cutoff), jnp.float32)
        dist_flat = jnp.concatenate([dist_flat, pad])
    dist_packed = dist_flat.reshape(packed_rows, group)            # metadata-only

    freq_tiled = jnp.tile(freq.astype(jnp.float32), group).reshape(1, lane_width)
    # E[j, j*num_radial + k] = 1 : exact lane replication of each distance on the MXU.
    expand = jnp.repeat(jnp.eye(group, dtype=jnp.float32), num_radial, axis=1)

    block_pr = _pick_block_rows(packed_rows, lane_width)
    grid = (pl.cdiv(packed_rows, block_pr),)

    p = int(envelope_exponent)
    a = -(p + 1) * (p + 2) / 2.0
    b = float(p * (p + 2))
    c = -p * (p + 1) / 2.0

    kernel = functools.partial(
        _bessel_kernel, inv_cutoff=1.0 / float(cutoff), p=p, a=a, b=b, c=c)

    cost = pl.CostEstimate(
        flops=int(padded_rows * num_radial * 10
                  + packed_rows * 2 * group * lane_width),
        transcendentals=int(padded_rows * (num_radial + 1)),
        bytes_accessed=int(padded_rows * 4
                           + lane_width * 4 * (group + 1)
                           + padded_rows * num_radial * jnp.dtype(out_dtype).itemsize),
    )

    out_packed = pl.pallas_call(
        kernel,
        out_shape=jax.ShapeDtypeStruct((packed_rows, lane_width), out_dtype),
        grid=grid,
        in_specs=[
            pl.BlockSpec((block_pr, group), lambda i: (i, 0)),
            pl.BlockSpec((1, lane_width), lambda i: (0, 0)),
            pl.BlockSpec((group, lane_width), lambda i: (0, 0)),
        ],
        out_specs=pl.BlockSpec((block_pr, lane_width), lambda i: (i, 0)),
        compiler_params=pltpu.CompilerParams(
            dimension_semantics=("parallel",),
        ),
        cost_estimate=cost,
    )(dist_packed, freq_tiled, expand)

    out = out_packed.reshape(padded_rows, num_radial)              # metadata-only
    if padded_rows != rows:
        out = out[:rows]
    return out.reshape(orig_shape + (num_radial,))


if __name__ == "__main__":
    key = jax.random.PRNGKey(0)
    num_radial = 16
    cutoff = 5.0
    envelope_exponent = 6
    num_edges = 300  # deliberately not a multiple of 8/128

    # Distances in (0.1, 6.0); some beyond the cutoff to exercise the envelope cut.
    dist = jax.random.uniform(key, (num_edges,), dtype=jnp.float32,
                              minval=0.1, maxval=6.0)
    # PyTorch reset_parameters(): freq = [1, 2, ..., num_radial] * pi
    freq = jnp.arange(1, num_radial + 1, dtype=jnp.float32) * math.pi

    y = bessel_basis_pallas(dist, freq, cutoff=cutoff,
                            envelope_exponent=envelope_exponent)
    jax.block_until_ready(y)

    # Pure-JAX reference mirroring the PyTorch module exactly.
    def ref(dist, freq, cutoff, p):
        x = dist[..., None] / cutoff
        a = -(p + 1) * (p + 2) / 2.0
        b = float(p * (p + 2))
        c = -p * (p + 1) / 2.0
        xp = x ** p
        xp1 = xp * x
        env = 1.0 / x + a * xp + b * xp1 + c * xp1 * x
        env = jnp.where(x < 1.0, env, jnp.zeros_like(x))
        return env * jnp.sin(freq * x)

    y_ref = ref(dist, freq, cutoff, envelope_exponent)
    assert y.shape == (num_edges, num_radial), y.shape
    max_err = float(jnp.max(jnp.abs(y - y_ref)))
    assert jnp.allclose(y, y_ref, atol=2e-3, rtol=2e-3), max_err
    print("KERNEL_OK")
</pallas_src>

<mosaic_0001>
module attributes {stable_mosaic.version = 11 : i64} {
  func.func @_bessel_kernel(%arg0: i32, %arg1: memref<24x8xf32, #tpu.memory_space<vmem>>, %arg2: memref<1x128xf32, #tpu.memory_space<vmem>>, %arg3: memref<8x128xf32, #tpu.memory_space<vmem>>, %arg4: memref<24x128xf32, #tpu.memory_space<vmem>>) attributes {dimension_semantics = [#tpu.dimension_semantics<parallel>], iteration_bounds = array<i64: 2>, scalar_prefetch = 0 : i64, scratch_operands = 0 : i64, tpu.core_type = #tpu.core_type<tc>, window_params = [{transform_indices = @transform_0, window_bounds = array<i64: 24, 8>}, {pipeline_mode = #tpu.pipeline_mode<synchronous>, transform_indices = @transform_1, window_bounds = array<i64: 1, 128>}, {pipeline_mode = #tpu.pipeline_mode<synchronous>, transform_indices = @transform_2, window_bounds = array<i64: 8, 128>}, {transform_indices = @transform_3, window_bounds = array<i64: 24, 128>}]} {
    %c0 = arith.constant 0 : index
    %c0_0 = arith.constant 0 : index
    %0 = vector.load %arg1[%c0, %c0_0] : memref<24x8xf32, #tpu.memory_space<vmem>>, vector<24x8xf32>
    %cst = arith.constant 2.000000e-01 : f32
    %1 = vector.broadcast %cst : f32 to vector<24x8xf32>
    %2 = arith.mulf %0, %1 : vector<24x8xf32>
    %c0_1 = arith.constant 0 : index
    %c0_2 = arith.constant 0 : index
    %3 = vector.load %arg3[%c0_1, %c0_2] : memref<8x128xf32, #tpu.memory_space<vmem>>, vector<8x128xf32>
    %cst_3 = arith.constant dense<0.000000e+00> : vector<24x128xf32>
    %4 = tpu.matmul %2, %3, %cst_3 {dimension_numbers = #tpu.dot_dimension_numbers<[1], [0], [0], [1], [0, 0, 1, 1], [], []>} : vector<24x8xf32>, vector<8x128xf32>, vector<24x128xf32> -> vector<24x128xf32>
    %5 = tpu.reciprocal %4 {approx = true} : vector<24x128xf32> -> vector<24x128xf32>
    %6 = arith.mulf %4, %5 : vector<24x128xf32>
    %cst_4 = arith.constant 2.000000e+00 : f32
    %7 = vector.broadcast %cst_4 : f32 to vector<24x128xf32>
    %8 = arith.subf %7, %6 : vector<24x128xf32>
    %9 = arith.mulf %5, %8 : vector<24x128xf32>
    %10 = arith.mulf %4, %4 : vector<24x128xf32>
    %11 = arith.mulf %10, %10 : vector<24x128xf32>
    %12 = arith.mulf %10, %11 : vector<24x128xf32>
    %13 = arith.mulf %12, %4 : vector<24x128xf32>
    %cst_5 = arith.constant -2.800000e+01 : f32
    %14 = vector.broadcast %cst_5 : f32 to vector<24x128xf32>
    %15 = arith.mulf %14, %12 : vector<24x128xf32>
    %16 = arith.addf %9, %15 : vector<24x128xf32>
    %cst_6 = arith.constant 4.800000e+01 : f32
    %17 = vector.broadcast %cst_6 : f32 to vector<24x128xf32>
    %18 = arith.mulf %17, %13 : vector<24x128xf32>
    %19 = arith.addf %16, %18 : vector<24x128xf32>
    %cst_7 = arith.constant -2.100000e+01 : f32
    %20 = vector.broadcast %cst_7 : f32 to vector<24x128xf32>
    %21 = arith.mulf %20, %13 : vector<24x128xf32>
    %22 = arith.mulf %21, %4 : vector<24x128xf32>
    %23 = arith.addf %19, %22 : vector<24x128xf32>
    %cst_8 = arith.constant 1.000000e+00 : f32
    %24 = vector.broadcast %cst_8 : f32 to vector<24x128xf32>
    %25 = arith.cmpf olt, %4, %24 : vector<24x128xf32>
    %cst_9 = arith.constant 0.000000e+00 : f32
    %26 = vector.broadcast %cst_9 : f32 to vector<24x128xf32>
    %27 = arith.select %25, %23, %26 : vector<24x128xi1>, vector<24x128xf32>
    %c0_10 = arith.constant 0 : index
    %c0_11 = arith.constant 0 : index
    %28 = vector.load %arg2[%c0_10, %c0_11] : memref<1x128xf32, #tpu.memory_space<vmem>>, vector<1x128xf32>
    %29 = vector.broadcast %28 : vector<1x128xf32> to vector<24x128xf32>
    %30 = arith.mulf %29, %4 : vector<24x128xf32>
    %31 = math.sin %30 : vector<24x128xf32>
    %32 = arith.mulf %27, %31 : vector<24x128xf32>
    %c0_12 = arith.constant 0 : index
    %c0_13 = arith.constant 0 : index
    %33 = vector.load %arg4[%c0_12, %c0_13] : memref<24x128xf32, #tpu.memory_space<vmem>>, vector<24x128xf32>
    tpu.vector_store %arg4[%c0_12, %c0_13], %32 {strides = array<i32>} : memref<24x128xf32, #tpu.memory_space<vmem>>, vector<24x128xf32>,
    return
  }
  func.func @transform_0(%arg0: i32) -> (i32, i32) {
    %c0_i32 = arith.constant 0 : i32
    %c0_i32_0 = arith.constant 0 : i32
    return %arg0, %c0_i32 : i32, i32
  }
  func.func @transform_1(%arg0: i32) -> (i32, i32) {
    %c0_i32 = arith.constant 0 : i32
    %c0_i32_0 = arith.constant 0 : i32
    %c0_i32_1 = arith.constant 0 : i32
    return %c0_i32, %c0_i32_0 : i32, i32
  }
  func.func @transform_2(%arg0: i32) -> (i32, i32) {
    %c0_i32 = arith.constant 0 : i32
    %c0_i32_0 = arith.constant 0 : i32
    %c0_i32_1 = arith.constant 0 : i32
    return %c0_i32, %c0_i32_0 : i32, i32
  }
  func.func @transform_3(%arg0: i32) -> (i32, i32) {
    %c0_i32 = arith.constant 0 : i32
    %c0_i32_0 = arith.constant 0 : i32
    return %arg0, %c0_i32 : i32, i32
  }
}

</mosaic_0001>

<llo_original>
// kernel: tpu_custom_call.1
$region0: #{tpu_custom_call.1}
  #allocation0 [shape = 'u32[]', space=smem, size = 0x4, offset = 0x4, fixed_abs, tag = 'smem constant byte address 0x4 - core index']
  #allocation1 [shape = 'u32[144,128]{1,0:T(1,128)}', space=vmem, size = 0x12000, scoped, tag = 'internal scratch']
  %s0 = inlined_call_operand.vmem [shape: f32[38,8], index: 0, kind: input, shape index: {}]
  %s1 = inlined_call_operand.vmem [shape: f32[1,128], index: 1, kind: input, shape index: {}]
  %s2 = inlined_call_operand.vmem [shape: f32[8,128], index: 2, kind: input, shape index: {}]
  %s3 = inlined_call_operand.hbm [shape: f32[38,128], index: 3, kind: output, shape index: {}]
  %s4 = sld [smem:[#allocation0]]
  $region45: #{tpu_custom_call.1} parent=0
    _
  %s6 = ssub.s32 1, %s4
  %s7 = scalar_select 0, %s6, %s4
  $region1: #{tpu_custom_call.1} parent=0
    #allocation2 [shape = 'u8[24576]{0}', space=vmem, size = 0x6000, scoped, tag = 'output window, operand 0']
    #allocation3 [shape = 's32[2]{0}', space=sflag, size = 0x8, scoped, tag = 'scoped memory for tpu_custom_call.1']
    %8 = vsyncpa [#allocation3], 0
    %s9 = scalar_lea.sflag [#allocation3], 1
    %10 = vsyncpa %s9, 0
    loop: start=0, step=1, limit=4
    $region2: #{tpu_custom_call.1} parent=1 // loop_pre_header
      _
    $region3: #{tpu_custom_call.1} parent=1 // loop_header
      %s12 = sphi 0, %s16
      %p13 = scmp.ge.s32.totalorder %s12, 4
      %s22 = sphi 0, %s24
      %s25 = sphi 0, %s22
      %s26 = sphi 0, %s25
      %s42 = sphi 0, %s26
      %s46 = sphi 0, %s46
      %s48 = sphi 0, %s46
      %s49 = sphi 0, %s48
      %s63 = sphi 0, %s49
      %s67 = sphi 0, %s67
      %s69 = sphi 0, %s67
      %s70 = sphi 0, %s69
      %s84 = sphi 0, %s70
      %s90 = sphi 0, %s92
      %s93 = sphi 0, %s90
      %s94 = sphi 0, %s93
      %s110 = sphi 0, %s94
    $region4: #{tpu_custom_call.1} parent=1 // loop_header_branch
      %15 = sbr.rel (%p13) target = $region8
    $region5: #{tpu_custom_call.1} parent=1 // loop_body
      %s17 = ssub.s32 %s12, 1
      %s18 = ssub.s32 %s12, 2
      %s19 = sadd.s32 %s12, 1
      %s20 = ssub.s32 %s12, %s19
      %p21 = scmp.eq.s32.totalorder %s20, 0
      %s23 = sadd.s32 %s22, 1
      %s24 = scalar_select %p21, %s22, %s23
      %p27 = pneg %p21
      %p28 = scmp.eq.s32.totalorder %s12, 1
      %p29 = por %p27, %p28
      %p30 = scmp.ne.s32.totalorder %s22, %s25
      %p31 = scmp.eq.s32.totalorder %s12, 0
      %p32 = por %p30, %p31
      %p33 = scmp.ne.s32.totalorder %s22, %s25
      %p34 = scmp.eq.s32.totalorder %s17, 1
      %p35 = por %p33, %p34
      %p36 = scmp.ne.s32.totalorder %s25, %s26
      %p37 = scmp.eq.s32.totalorder %s17, 0
      %p38 = por %p36, %p37
      %p39 = scmp.ne.s32.totalorder %s25, %s26
      %p40 = scmp.eq.s32.totalorder %s18, 1
      %p41 = por %p39, %p40
      %p43 = scmp.ne.s32.totalorder %s26, %s42
      %p44 = scmp.eq.s32.totalorder %s18, 0
      %p45 = por %p43, %p44
      %s47 = sadd.s32 %s46, 1
      %p50 = scmp.eq.s32.totalorder %s12, 1
      %p51 = scmp.ne.s32.totalorder %s46, %s48
      %p52 = scmp.eq.s32.totalorder %s12, 0
      %p53 = por %p51, %p52
      %p54 = scmp.ne.s32.totalorder %s46, %s48
      %p55 = scmp.eq.s32.totalorder %s17, 1
      %p56 = por %p54, %p55
      %p57 = scmp.ne.s32.totalorder %s48, %s49
      %p58 = scmp.eq.s32.totalorder %s17, 0
      %p59 = por %p57, %p58
      %p60 = scmp.ne.s32.totalorder %s48, %s49
      %p61 = scmp.eq.s32.totalorder %s18, 1
      %p62 = por %p60, %p61
      %p64 = scmp.ne.s32.totalorder %s49, %s63
      %p65 = scmp.eq.s32.totalorder %s18, 0
      %p66 = por %p64, %p65
      %s68 = sadd.s32 %s67, 1
      %p71 = scmp.eq.s32.totalorder %s12, 1
      %p72 = scmp.ne.s32.totalorder %s67, %s69
      %p73 = scmp.eq.s32.totalorder %s12, 0
      %p74 = por %p72, %p73
      %p75 = scmp.ne.s32.totalorder %s67, %s69
      %p76 = scmp.eq.s32.totalorder %s17, 1
      %p77 = por %p75, %p76
      %p78 = scmp.ne.s32.totalorder %s69, %s70
      %p79 = scmp.eq.s32.totalorder %s17, 0
      %p80 = por %p78, %p79
      %p81 = scmp.ne.s32.totalorder %s69, %s70
      %p82 = scmp.eq.s32.totalorder %s18, 1
      %p83 = por %p81, %p82
      %p85 = scmp.ne.s32.totalorder %s70, %s84
      %p86 = scmp.eq.s32.totalorder %s18, 0
      %p87 = por %p85, %p86
      %s88 = ssub.s32 %s12, %s19
      %p89 = scmp.eq.s32.totalorder %s88, 0
      %s91 = sadd.s32 %s90, 1
      %s92 = scalar_select %p89, %s90, %s91
      %p95 = pneg %p89
      %p96 = scmp.eq.s32.totalorder %s12, 1
      %p97 = por %p95, %p96
      %p98 = scmp.ne.s32.totalorder %s90, %s93
      %p99 = scmp.eq.s32.totalorder %s12, 0
      %p100 = por %p98, %p99
      %p101 = scmp.ne.s32.totalorder %s90, %s93
      %p102 = scmp.eq.s32.totalorder %s17, 1
      %p103 = por %p101, %p102
      %p104 = scmp.ne.s32.totalorder %s93, %s94
      %p105 = scmp.eq.s32.totalorder %s17, 0
      %p106 = por %p104, %p105
      %p107 = scmp.ne.s32.totalorder %s93, %s94
      %p108 = scmp.eq.s32.totalorder %s18, 1
      %p109 = por %p107, %p108
      %p111 = scmp.ne.s32.totalorder %s94, %s110
      %p112 = scmp.eq.s32.totalorder %s18, 0
      %p113 = por %p111, %p112
      %p114 = scmp.le.s32.totalorder 1, %s12
      %p115 = scmp.lt.s32.totalorder %s12, 3
      %p116 = pnand %p114, %p115
      %p117 = pneg %p116
      // Predicated region
      $region9: #{tpu_custom_call.1} parent=5 // pred_check
        _
      $region10: #{tpu_custom_call.1} parent=5 // pred_check_branch
        %119 = sbr.rel (%p116) target = $region12
      $region11: #{tpu_custom_call.1} parent=5 // pred_region
        %s120 = ssub.s32 %s12, 1
        // Predicated region
        $region13: #{tpu_custom_call.1} parent=11 // pred_check
          %p121 = pneg %p59
        $region14: #{tpu_custom_call.1} parent=11 // pred_check_branch
          %123 = sbr.rel (%p121) target = $region16
        $region15: #{tpu_custom_call.1} parent=11 // pred_region
          _
        $region16: #{tpu_custom_call.1} parent=11 // pred_fallthru
          _
        // Predicated region
        $region17: #{tpu_custom_call.1} parent=11 // pred_check
          %p124 = pneg %p80
        $region18: #{tpu_custom_call.1} parent=11 // pred_check_branch
          %126 = sbr.rel (%p124) target = $region20
        $region19: #{tpu_custom_call.1} parent=11 // pred_region
          _
        $region20: #{tpu_custom_call.1} parent=11 // pred_fallthru
          _
      $region12: #{tpu_custom_call.1} parent=5 // pred_fallthru
        _
      %p127 = scmp.lt.s32.totalorder %s12, 2
      // Predicated region
      $region21: #{tpu_custom_call.1} parent=5 // pred_check
        %p128 = pneg %p127
      $region22: #{tpu_custom_call.1} parent=5 // pred_check_branch
        %130 = sbr.rel (%p128) target = $region24
      $region23: #{tpu_custom_call.1} parent=5 // pred_region
        // Predicated region
        $region25: #{tpu_custom_call.1} parent=23 // pred_check
          %p131 = pneg %p32
        $region26: #{tpu_custom_call.1} parent=23 // pred_check_branch
          %133 = sbr.rel (%p131) target = $region28
        $region27: #{tpu_custom_call.1} parent=23 // pred_region
          %s134 = smul.u32 3, %s12
          %s135 = ssub.s32 5, %s134
          %p136 = scmp.lt.s32.totalorder %s135, 3
          %s137 = scalar_select %p136, %s135, 3
          %s138 = smul.u32 128, %s137
          %p139 = scmp.lt.s32.totalorder %s134, 4
          %s140 = scalar_select %p139, %s134, 4
          %s141 = smul.addr %s140, 8
          %s142 = scalar_lea.vmem %s0, %s141
          %s143 = smul.u32 3, %s12
          %s144 = ssub.s32 5, %s143
          %p145 = scmp.lt.s32.totalorder %s144, 3
          %s146 = scalar_select %p145, %s144, 3
          %s147 = smul.u32 128, %s146
        $region28: #{tpu_custom_call.1} parent=23 // pred_fallthru
          _
      $region24: #{tpu_custom_call.1} parent=5 // pred_fallthru
        _
      %p148 = scmp.le.s32.totalorder 1, %s12
      %p149 = scmp.lt.s32.totalorder %s12, 3
      %p150 = pnand %p148, %p149
      %p151 = pneg %p150
      // Predicated region
      $region29: #{tpu_custom_call.1} parent=5 // pred_check
        _
      $region30: #{tpu_custom_call.1} parent=5 // pred_check_branch
        %153 = sbr.rel (%p150) target = $region32
      $region31: #{tpu_custom_call.1} parent=5 // pred_region
        %s154 = ssub.s32 %s12, 1
        %s155 = smul.u32 3, %s17
        %s156 = ssub.s32 5, %s155
        %p157 = scmp.lt.s32.totalorder %s156, 3
        %s158 = scalar_select %p157, %s156, 3
        %s159 = smul.u32 128, %s158
        %p160 = scmp.lt.s32.totalorder %s155, 4
        %s161 = scalar_select %p160, %s155, 4
        %s162 = smul.addr %s161, 8
        %s163 = scalar_lea.vmem %s0, %s162
        %p164 = pneg %p38
        %p165 = pneg %p35
        %p166 = pneg %p59
        %p167 = pneg %p56
        %p168 = pneg %p80
        %p169 = pneg %p77
        %p170 = pneg %p106
        %p171 = pneg %p103
        %s172 = sand.u32 %s93, 1
        %s173 = scalar_lea.sflag [#allocation3], %s172
        %s174 = sand.u32 %s93, 1
        %s175 = smul.addr %s174, 24
        %s176 = scalar_lea.vmem [#allocation2], %s175
        %s177 = smul.u32 3, %s17
        %s178 = ssub.s32 5, %s177
        %p179 = scmp.lt.s32.totalorder %s178, 3
        %s180 = scalar_select %p179, %s178, 3
        %s181 = smul.u32 128, %s180
        %p182 = scmp.lt.s32.totalorder %s177, 4
        %s183 = scalar_select %p182, %s177, 4
        %s184 = smul.addr %s183, 8
        %s185 = scalar_lea.vmem %s0, %s184
        %s186 = smul.u32 3, %s17
        %s187 = ssub.s32 5, %s186
        %p188 = scmp.lt.s32.totalorder %s187, 3
        %s189 = scalar_select %p188, %s187, 3
        %s190 = smul.u32 128, %s189
        %s191 = smul.u32 3, %s17
        %s192 = ssub.s32 5, %s191
        %p193 = scmp.lt.s32.totalorder %s192, 3
        %s194 = scalar_select %p193, %s192, 3
        %s195 = smul.u32 128, %s194
        %v196 = vld [vmem:[%s185] sm:$0xff]
        %v197 = vld [vmem:[%s185 + $0x8] sm:$0xff]
        %v198 = vld [vmem:[%s185 + $0x10] sm:$0xff]
        %v199 = vmul.f32 %v196, 0.2
        %v200 = vmul.f32 %v197, 0.2
        %v201 = vmul.f32 %v198, 0.2
        %v202 = vld [vmem:[%s2] sm:$0xff]
        %vm203 = vcmask 64512
        %v205 = vsel %vm203, %v199, 0
        %v208 = vsel %vm203, %v200, 0
        %v211 = vsel %vm203, %v201, 0
        %213 = vmatprep.subr.mxu0 0.0
        %214 = vmatpush1.msra.mxu0 %v202
        %215 = vmatprep.subr.mxu0 0.0
        %216 = vmatpush1.msra.mxu0 0.0
        %217 = vmatprep.subr.mxu0 0.0
        %218 = vmatpush1.msra.mxu0 0.0
        %219 = vmatprep.subr.mxu0 0.0
        %220 = vmatpush1.msra.mxu0 0.0
        %221 = vmatprep.subr.mxu0 0.0
        %222 = vmatpush1.msra.mxu0 0.0
        %223 = vmatprep.subr.mxu0 0.0
        %224 = vmatpush1.msra.mxu0 0.0
        %225 = vmatprep.subr.mxu0 0.0
        %226 = vmatpush1.msra.mxu0 0.0
        %227 = vmatprep.subr.mxu0 0.0
        %228 = vmatpush1.msra.mxu0 0.0
        %229 = vmatprep.subr.mxu0 0.0
        %230 = vmatpush1.msra.mxu0 0.0
        %231 = vmatprep.subr.mxu0 0.0
        %232 = vmatpush1.msra.mxu0 0.0
        %233 = vmatprep.subr.mxu0 0.0
        %234 = vmatpush1.msra.mxu0 0.0
        %235 = vmatprep.subr.mxu0 0.0
        %236 = vmatpush1.msra.mxu0 0.0
        %237 = vmatprep.subr.mxu0 0.0
        %238 = vmatpush1.msra.mxu0 0.0
        %239 = vmatprep.subr.mxu0 0.0
        %240 = vmatpush1.msra.mxu0 0.0
        %241 = vmatprep.subr.mxu0 0.0
        %242 = vmatpush1.msra.mxu0 0.0
        %243 = vmatprep.subr.mxu0 0.0
        %244 = vmatpush1.msra.mxu0 0.0
        %245 = vmatprep.subr.mxu0 0.0
        %246 = vmatpush1.msra.mxu0 0.0
        %247 = vmatprep.subr.mxu0 0.0
        %248 = vmatpush1.msra.mxu0 0.0
        %249 = vmatprep.subr.mxu0 0.0
        %250 = vmatpush1.msra.mxu0 0.0
        %251 = vmatprep.subr.mxu0 0.0
        %252 = vmatpush1.msra.mxu0 0.0
        %253 = vmatprep.subr.mxu0 0.0
        %254 = vmatpush1.msra.mxu0 0.0
        %255 = vmatprep.subr.mxu0 0.0
        %256 = vmatpush1.msra.mxu0 0.0
        %257 = vmatprep.subr.mxu0 0.0
        %258 = vmatpush1.msra.mxu0 0.0
        %259 = vmatprep.subr.mxu0 0.0
        %260 = vmatpush1.msra.mxu0 0.0
        %261 = vmatprep.subr.mxu0 0.0
        %262 = vmatpush1.msra.mxu0 0.0
        %263 = vmatprep.subr.mxu0 0.0
        %264 = vmatpush1.msra.mxu0 0.0
        %265 = vmatprep.subr.mxu0 0.0
        %266 = vmatpush1.msra.mxu0 0.0
        %267 = vmatprep.subr.mxu0 0.0
        %268 = vmatpush1.msra.mxu0 0.0
        %269 = vmatprep.subr.mxu0 0.0
        %270 = vmatpush1.msra.mxu0 0.0
        %271 = vmatprep.subr.mxu0 0.0
        %272 = vmatpush1.msra.mxu0 0.0
        %273 = vmatprep.subr.mxu0 0.0
        %274 = vmatpush1.msra.mxu0 0.0
        %275 = vmatprep.subr.mxu0 0.0
        %276 = vmatpush1.msra.mxu0 0.0
        %277 = vmatprep.mubr.f32.mxu0 0.0
        %278 = vmatmul.mubr.f32.gmra.mrb[0].mxu0 %v205
        %v279 = vpop.f32.mrb[0].mxu0
        %v280 = vadd.f32 0.0, %v279
        %v281 = vpop.f32.mrb[0].mxu0
        %282 = vmatprep.mubr.f32.mxu0 0.0
        %283 = vmatmul.mubr.f32.gmra.mrb[0].mxu0 %v208
        %v284 = vpop.f32.mrb[0].mxu0
        %v285 = vadd.f32 0.0, %v284
        %v286 = vpop.f32.mrb[0].mxu0
        %287 = vmatprep.mubr.f32.mxu0 0.0
        %288 = vmatmul.mubr.f32.gmra.mrb[0].mxu0 %v211
        %v289 = vpop.f32.mrb[0].mxu0
        %v290 = vadd.f32 0.0, %v289
        %v291 = vpop.f32.mrb[0].mxu0
        %292 = vdwg.mxu0
        %v293 = vrcp.pop %v280
        %v294 = vrcp.pop %v285
        %v295 = vrcp.pop %v290
        %v296 = vmul.f32 %v280, %v293
        %v297 = vmul.f32 %v285, %v294
        %v298 = vmul.f32 %v290, %v295
        %v299 = vsub.f32 2.0, %v296
        %v300 = vsub.f32 2.0, %v297
        %v301 = vsub.f32 2.0, %v298
        %v302 = vmul.f32 %v293, %v299
        %v303 = vmul.f32 %v294, %v300
        %v304 = vmul.f32 %v295, %v301
        %v305 = vmul.f32 %v280, %v280
        %v306 = vmul.f32 %v285, %v285
        %v307 = vmul.f32 %v290, %v290
        %v308 = vmul.f32 %v305, %v305
        %v309 = vmul.f32 %v306, %v306
        %v310 = vmul.f32 %v307, %v307
        %v311 = vmul.f32 %v305, %v308
        %v312 = vmul.f32 %v306, %v309
        %v313 = vmul.f32 %v307, %v310
        %v314 = vmul.f32 %v311, %v280
        %v315 = vmul.f32 %v312, %v285
        %v316 = vmul.f32 %v313, %v290
        %v317 = vmul.f32 %v311, -28.0
        %v318 = vmul.f32 %v312, -28.0
        %v319 = vmul.f32 %v313, -28.0
        %v320 = vadd.f32 %v302, %v317
        %v321 = vadd.f32 %v303, %v318
        %v322 = vadd.f32 %v304, %v319
        %v323 = vmul.f32 %v314, 48.0
        %v324 = vmul.f32 %v315, 48.0
        %v325 = vmul.f32 %v316, 48.0
        %v326 = vadd.f32 %v320, %v323
        %v327 = vadd.f32 %v321, %v324
        %v328 = vadd.f32 %v322, %v325
        %v329 = vmul.f32 %v314, -21.0
        %v330 = vmul.f32 %v315, -21.0
        %v331 = vmul.f32 %v316, -21.0
        %v332 = vmul.f32 %v329, %v280
        %v333 = vmul.f32 %v330, %v285
        %v334 = vmul.f32 %v331, %v290
        %v335 = vadd.f32 %v326, %v332
        %v336 = vadd.f32 %v327, %v333
        %v337 = vadd.f32 %v328, %v334
        %vm338 = vcmp.lt.f32.partialorder %v280, 1.0
        %vm339 = vcmp.lt.f32.partialorder %v285, 1.0
        %vm340 = vcmp.lt.f32.partialorder %v290, 1.0
        %v341 = vsel %vm338, %v335, 0.0
        %v342 = vsel %vm339, %v336, 0.0
        %v343 = vsel %vm340, %v337, 0.0
        %v344 = vld [vmem:[%s1] sm:$0x1]
        %v346 = vlaneseq
        %v347 = vshrl.u32 %v346, 7
        %v348 = vsub.s32 0, %v347
        %v349 = vrot.slane %v344, %v348
        %v351 = vmul.f32 %v349, %v280
        %v352 = vmul.f32 %v349, %v285
        %v353 = vmul.f32 %v349, %v290
        %v354 = vand.u32 2147483647, %v351
        %vm355 = vcmp.le.f32.partialorder %v354, 0.7853982
        %vm356 = vcmp.lt.s32.totalorder %v351, 0
        %v357 = vand.u32 %v351, 2139095040
        %v358 = vshrl.u32 %v357, 23
        %v359 = vsub.s32 %v358, 127
        %v360 = vand.u32 2147483647, %v351
        %v361 = vand.u32 %v360, 8388607
        %v362 = vor.u32 %v361, 8388608
        %v363 = vsub.s32 0, %v362
        %v364 = vadd.s32 %v359, 1
        %vm365 = vcmp.gt.s32.totalorder %v364, 0
        %v366 = vsel %vm365, %v364, 0
        %v367 = vshrl.u32 %v366, 5
        %v368 = vand.u32 %v366, 31
        %v369 = vsub.s32 32, %v368
        %v370 = vshrl.u32 683565275, %v369
        %v371 = vshll.u32 683565275, %v368
        %v372 = vshrl.u32 2475754826, %v369
        %v373 = vor.u32 %v371, %v372
        %v374 = vshll.u32 2475754826, %v368
        %v375 = vshrl.u32 2131351028, %v369
        %v376 = vor.u32 %v374, %v375
        %v377 = vshll.u32 2131351028, %v368
        %v378 = vshrl.u32 2102212464, %v369
        %v379 = vor.u32 %v377, %v378
        %v380 = vshll.u32 2102212464, %v368
        %v381 = vshrl.u32 920167782, %v369
        %v382 = vor.u32 %v380, %v381
        %v383 = vshll.u32 920167782, %v368
        %v384 = vshrl.u32 1326507024, %v369
        %v385 = vor.u32 %v383, %v384
        %vm386 = vcmp.lt.s32.totalorder %v367, 1
        %vm387 = vcmp.lt.s32.totalorder %v367, 2
        %vm388 = vcmp.lt.s32.totalorder %v367, 3
        %vm389 = vcmp.lt.s32.totalorder %v367, 4
        %v390 = vsel %vm386, %v370, %v373
        %v391 = vsel %vm389, %v379, 2102212464
        %v392 = vsel %vm388, %v376, %v391
        %v393 = vsel %vm387, %v390, %v392
        %v394 = vsel %vm386, %v373, %v376
        %v395 = vsel %vm389, %v382, 920167782
        %v396 = vsel %vm388, %v379, %v395
        %v397 = vsel %vm387, %v394, %v396
        %v398 = vsel %vm386, %v376, %v379
        %v399 = vsel %vm389, %v385, 1326507024
        %v400 = vsel %vm388, %v382, %v399
        %v401 = vsel %vm387, %v398, %v400
        %v402 = vshll.u32 %v362, 8
        %v403 = vmul.u32.u64.compose %v402, %v401
        %v404 = vextract.low.u32 %v403
        %v405 = vextract.high.u32 %v403
        %v406 = vmul.u32.u64.compose %v402, %v397
        %v407 = vextract.low.u32 %v406
        %v408 = vextract.high.u32 %v406
        %v409 = vmul.u32 %v402, %v393
        %v410 = vadd.s32 %v405, %v407
        %vm411 = vc.u32 %v405, %v407
        %v412 = vadd.s32 %v408, 1
        %v413 = vsel %vm411, %v412, %v408
        %v414 = vadd.s32 %v409, %v413
        %v415 = vadd.s32 %v414, 536870912
        %v416 = vshrl.u32 %v415, 30
        %v417 = vshll.u32 %v416, 30
        %v418 = vsub.s32 %v414, %v417
        %vm419 = vcmp.lt.s32.totalorder %v418, 0
        %v420 = vsub.s32 0, %v418
        %v421 = vsel %vm419, %v420, %v418
        %v422 = vclz %v421
        %v423 = vsub.s32 %v422, 2
        %vm424 = vcmp.gt.s32.totalorder 0, %v423
        %v425 = vsel %vm424, 0, %v423
        %v426 = vsub.s32 32, %v425
        %v427 = vshll.u32 %v418, %v425
        %v428 = vshrl.u32 %v410, %v426
        %v429 = vor.u32 %v427, %v428
        %v430 = vsub.s32 4294967266, %v425
        %v431 = vadd.s32 %v430, 127
        %v432 = vshll.u32 %v431, 23
        %v433 = vor.u32 4788187, %v432
        %v434 = vand.u32 2147483647, %v433
        %v436 = vcvt.s32.f32 %v429
        %v437 = vmul.f32 %v436, %v434
        %v438 = vxor.u32 %v437, 2147483648
        %v439 = vsel %vm356, %v438, %v437
        %v440 = vsub.s32 4, %v416
        %v441 = vsel %vm356, %v440, %v416
        %v442 = vsel %vm355, %v351, %v439
        %v443 = vsel %vm355, 0, %v441
        %v444 = vcosq.f32.pop %v442
        %v445 = vsinq.f32.pop %v442
        %vm446 = vweird.f32 %v351
        %v447 = vadd.s32 %v443, 3
        %v448 = vand.u32 %v447, 3
        %vm449 = vcmp.lt.s32.totalorder %v448, 2
        %vm450 = vcmp.eq.s32.totalorder %v448, 0
        %v451 = vxor.u32 %v445, 2147483648
        %v452 = vsel %vm450, %v444, %v451
        %vm453 = vcmp.eq.s32.totalorder %v448, 2
        %v454 = vxor.u32 %v444, 2147483648
        %v455 = vsel %vm453, %v454, %v445
        %v456 = vsel %vm449, %v452, %v455
        %v457 = vsel %vm446, nan, %v456
        %v458 = vand.u32 2147483647, %v352
        %vm459 = vcmp.le.f32.partialorder %v458, 0.7853982
        %vm460 = vcmp.lt.s32.totalorder %v352, 0
        %v461 = vand.u32 %v352, 2139095040
        %v462 = vshrl.u32 %v461, 23
        %v463 = vsub.s32 %v462, 127
        %v464 = vand.u32 2147483647, %v352
        %v465 = vand.u32 %v464, 8388607
        %v466 = vor.u32 %v465, 8388608
        %v467 = vsub.s32 0, %v466
        %v468 = vadd.s32 %v463, 1
        %vm469 = vcmp.gt.s32.totalorder %v468, 0
        %v470 = vsel %vm469, %v468, 0
        %v471 = vshrl.u32 %v470, 5
        %v472 = vand.u32 %v470, 31
        %v473 = vsub.s32 32, %v472
        %v474 = vshrl.u32 683565275, %v473
        %v475 = vshll.u32 683565275, %v472
        %v476 = vshrl.u32 2475754826, %v473
        %v477 = vor.u32 %v475, %v476
        %v478 = vshll.u32 2475754826, %v472
        %v479 = vshrl.u32 2131351028, %v473
        %v480 = vor.u32 %v478, %v479
        %v481 = vshll.u32 2131351028, %v472
        %v482 = vshrl.u32 2102212464, %v473
        %v483 = vor.u32 %v481, %v482
        %v484 = vshll.u32 2102212464, %v472
        %v485 = vshrl.u32 920167782, %v473
        %v486 = vor.u32 %v484, %v485
        %v487 = vshll.u32 920167782, %v472
        %v488 = vshrl.u32 1326507024, %v473
        %v489 = vor.u32 %v487, %v488
        %vm490 = vcmp.lt.s32.totalorder %v471, 1
        %vm491 = vcmp.lt.s32.totalorder %v471, 2
        %vm492 = vcmp.lt.s32.totalorder %v471, 3
        %vm493 = vcmp.lt.s32.totalorder %v471, 4
        %v494 = vsel %vm490, %v474, %v477
        %v495 = vsel %vm493, %v483, 2102212464
        %v496 = vsel %vm492, %v480, %v495
        %v497 = vsel %vm491, %v494, %v496
        %v498 = vsel %vm490, %v477, %v480
        %v499 = vsel %vm493, %v486, 920167782
        %v500 = vsel %vm492, %v483, %v499
        %v501 = vsel %vm491, %v498, %v500
        %v502 = vsel %vm490, %v480, %v483
        %v503 = vsel %vm493, %v489, 1326507024
        %v504 = vsel %vm492, %v486, %v503
        %v505 = vsel %vm491, %v502, %v504
        %v506 = vshll.u32 %v466, 8
        %v507 = vmul.u32.u64.compose %v506, %v505
        %v508 = vextract.low.u32 %v507
        %v509 = vextract.high.u32 %v507
        %v510 = vmul.u32.u64.compose %v506, %v501
        %v511 = vextract.low.u32 %v510
        %v512 = vextract.high.u32 %v510
        %v513 = vmul.u32 %v506, %v497
        %v514 = vadd.s32 %v509, %v511
        %vm515 = vc.u32 %v509, %v511
        %v516 = vadd.s32 %v512, 1
        %v517 = vsel %vm515, %v516, %v512
        %v518 = vadd.s32 %v513, %v517
        %v519 = vadd.s32 %v518, 536870912
        %v520 = vshrl.u32 %v519, 30
        %v521 = vshll.u32 %v520, 30
        %v522 = vsub.s32 %v518, %v521
        %vm523 = vcmp.lt.s32.totalorder %v522, 0
        %v524 = vsub.s32 0, %v522
        %v525 = vsel %vm523, %v524, %v522
        %v526 = vclz %v525
        %v527 = vsub.s32 %v526, 2
        %vm528 = vcmp.gt.s32.totalorder 0, %v527
        %v529 = vsel %vm528, 0, %v527
        %v530 = vsub.s32 32, %v529
        %v531 = vshll.u32 %v522, %v529
        %v532 = vshrl.u32 %v514, %v530
        %v533 = vor.u32 %v531, %v532
        %v534 = vsub.s32 4294967266, %v529
        %v535 = vadd.s32 %v534, 127
        %v536 = vshll.u32 %v535, 23
        %v537 = vor.u32 4788187, %v536
        %v538 = vand.u32 2147483647, %v537
        %v540 = vcvt.s32.f32 %v533
        %v541 = vmul.f32 %v540, %v538
        %v542 = vxor.u32 %v541, 2147483648
        %v543 = vsel %vm460, %v542, %v541
        %v544 = vsub.s32 4, %v520
        %v545 = vsel %vm460, %v544, %v520
        %v546 = vsel %vm459, %v352, %v543
        %v547 = vsel %vm459, 0, %v545
        %v548 = vcosq.f32.pop %v546
        %v549 = vsinq.f32.pop %v546
        %vm550 = vweird.f32 %v352
        %v551 = vadd.s32 %v547, 3
        %v552 = vand.u32 %v551, 3
        %vm553 = vcmp.lt.s32.totalorder %v552, 2
        %vm554 = vcmp.eq.s32.totalorder %v552, 0
        %v555 = vxor.u32 %v549, 2147483648
        %v556 = vsel %vm554, %v548, %v555
        %vm557 = vcmp.eq.s32.totalorder %v552, 2
        %v558 = vxor.u32 %v548, 2147483648
        %v559 = vsel %vm557, %v558, %v549
        %v560 = vsel %vm553, %v556, %v559
        %v561 = vsel %vm550, nan, %v560
        %v562 = vand.u32 2147483647, %v353
        %vm563 = vcmp.le.f32.partialorder %v562, 0.7853982
        %vm564 = vcmp.lt.s32.totalorder %v353, 0
        %v565 = vand.u32 %v353, 2139095040
        %v566 = vshrl.u32 %v565, 23
        %v567 = vsub.s32 %v566, 127
        %v568 = vand.u32 2147483647, %v353
        %v569 = vand.u32 %v568, 8388607
        %v570 = vor.u32 %v569, 8388608
        %v571 = vsub.s32 0, %v570
        %v572 = vadd.s32 %v567, 1
        %vm573 = vcmp.gt.s32.totalorder %v572, 0
        %v574 = vsel %vm573, %v572, 0
        %v575 = vshrl.u32 %v574, 5
        %v576 = vand.u32 %v574, 31
        %v577 = vsub.s32 32, %v576
        %v578 = vshrl.u32 683565275, %v577
        %v579 = vshll.u32 683565275, %v576
        %v580 = vshrl.u32 2475754826, %v577
        %v581 = vor.u32 %v579, %v580
        %v582 = vshll.u32 2475754826, %v576
        %v583 = vshrl.u32 2131351028, %v577
        %v584 = vor.u32 %v582, %v583
        %v585 = vshll.u32 2131351028, %v576
        %v586 = vshrl.u32 2102212464, %v577
        %v587 = vor.u32 %v585, %v586
        %v588 = vshll.u32 2102212464, %v576
        %v589 = vshrl.u32 920167782, %v577
        %v590 = vor.u32 %v588, %v589
        %v591 = vshll.u32 920167782, %v576
        %v592 = vshrl.u32 1326507024, %v577
        %v593 = vor.u32 %v591, %v592
        %vm594 = vcmp.lt.s32.totalorder %v575, 1
        %vm595 = vcmp.lt.s32.totalorder %v575, 2
        %vm596 = vcmp.lt.s32.totalorder %v575, 3
        %vm597 = vcmp.lt.s32.totalorder %v575, 4
        %v598 = vsel %vm594, %v578, %v581
        %v599 = vsel %vm597, %v587, 2102212464
        %v600 = vsel %vm596, %v584, %v599
        %v601 = vsel %vm595, %v598, %v600
        %v602 = vsel %vm594, %v581, %v584
        %v603 = vsel %vm597, %v590, 920167782
        %v604 = vsel %vm596, %v587, %v603
        %v605 = vsel %vm595, %v602, %v604
        %v606 = vsel %vm594, %v584, %v587
        %v607 = vsel %vm597, %v593, 1326507024
        %v608 = vsel %vm596, %v590, %v607
        %v609 = vsel %vm595, %v606, %v608
        %v610 = vshll.u32 %v570, 8
        %v611 = vmul.u32.u64.compose %v610, %v609
        %v612 = vextract.low.u32 %v611
        %v613 = vextract.high.u32 %v611
        %v614 = vmul.u32.u64.compose %v610, %v605
        %v615 = vextract.low.u32 %v614
        %v616 = vextract.high.u32 %v614
        %v617 = vmul.u32 %v610, %v601
        %v618 = vadd.s32 %v613, %v615
        %vm619 = vc.u32 %v613, %v615
        %v620 = vadd.s32 %v616, 1
        %v621 = vsel %vm619, %v620, %v616
        %v622 = vadd.s32 %v617, %v621
        %v623 = vadd.s32 %v622, 536870912
        %v624 = vshrl.u32 %v623, 30
        %v625 = vshll.u32 %v624, 30
        %v626 = vsub.s32 %v622, %v625
        %vm627 = vcmp.lt.s32.totalorder %v626, 0
        %v628 = vsub.s32 0, %v626
        %v629 = vsel %vm627, %v628, %v626
        %v630 = vclz %v629
        %v631 = vsub.s32 %v630, 2
        %vm632 = vcmp.gt.s32.totalorder 0, %v631
        %v633 = vsel %vm632, 0, %v631
        %v634 = vsub.s32 32, %v633
        %v635 = vshll.u32 %v626, %v633
        %v636 = vshrl.u32 %v618, %v634
        %v637 = vor.u32 %v635, %v636
        %v638 = vsub.s32 4294967266, %v633
        %v639 = vadd.s32 %v638, 127
        %v640 = vshll.u32 %v639, 23
        %v641 = vor.u32 4788187, %v640
        %v642 = vand.u32 2147483647, %v641
        %v644 = vcvt.s32.f32 %v637
        %v645 = vmul.f32 %v644, %v642
        %v646 = vxor.u32 %v645, 2147483648
        %v647 = vsel %vm564, %v646, %v645
        %v648 = vsub.s32 4, %v624
        %v649 = vsel %vm564, %v648, %v624
        %v650 = vsel %vm563, %v353, %v647
        %v651 = vsel %vm563, 0, %v649
        %v652 = vcosq.f32.pop %v650
        %v653 = vsinq.f32.pop %v650
        %vm654 = vweird.f32 %v353
        %v655 = vadd.s32 %v651, 3
        %v656 = vand.u32 %v655, 3
        %vm657 = vcmp.lt.s32.totalorder %v656, 2
        %vm658 = vcmp.eq.s32.totalorder %v656, 0
        %v659 = vxor.u32 %v653, 2147483648
        %v660 = vsel %vm658, %v652, %v659
        %vm661 = vcmp.eq.s32.totalorder %v656, 2
        %v662 = vxor.u32 %v652, 2147483648
        %v663 = vsel %vm661, %v662, %v653
        %v664 = vsel %vm657, %v660, %v663
        %v665 = vsel %vm654, nan, %v664
        %v666 = vmul.f32 %v341, %v457
        %v667 = vmul.f32 %v342, %v561
        %v668 = vmul.f32 %v343, %v665
        %669 = vst [vmem:[%s176] sm:$0xff] %v666
        %670 = vst [vmem:[%s176 + $0x8] sm:$0xff] %v667
        %671 = vst [vmem:[%s176 + $0x10] sm:$0xff] %v668
        %s672 = sand.u32 %s93, 1
        %s673 = scalar_lea.sflag [#allocation3], %s672
        %s674 = sand.u32 %s93, 1
        %s675 = smul.addr %s674, 24
        %s676 = scalar_lea.vmem [#allocation2], %s675
        // Predicated region
        $region33: #{tpu_custom_call.1} parent=31 // pred_check
          %p677 = pneg %p103
        $region34: #{tpu_custom_call.1} parent=31 // pred_check_branch
          %679 = sbr.rel (%p677) target = $region36
        $region35: #{tpu_custom_call.1} parent=31 // pred_region
          %s680 = smul.u32 3, %s17
          %s681 = ssub.s32 5, %s680
          %p682 = scmp.lt.s32.totalorder %s681, 3
          %s683 = scalar_select %p682, %s681, 3
          %s684 = smul.u32 128, %s683
          %s686 = ssub.s32 384, %s684
          %687 = vsyncadd %s673, %s686
          %p688 = scmp.ne.s32.totalorder 0, %s684
          %s689 = smul.addr %s680, 128
          %s690 = scalar_lea.hbm %s3, %s689
          %s691 = smul.u32 8, %s683
          %s692 = sshll.u32 %s676, 4
          %s693 = int_to_ptr.vmem [resolvable:$true] %s692
          %s694 = sshll.u32 %s691, 4
          %698 = dma.vmem_to_hbm [thread:$0]  (%p688), %s693, %s694, %s690, %s673, 128, 128, 8
        $region36: #{tpu_custom_call.1} parent=31 // pred_fallthru
          _
      $region32: #{tpu_custom_call.1} parent=5 // pred_fallthru
        _
      %p699 = scmp.le.s32.totalorder 2, %s12
      // Predicated region
      $region37: #{tpu_custom_call.1} parent=5 // pred_check
        %p700 = pneg %p699
      $region38: #{tpu_custom_call.1} parent=5 // pred_check_branch
        %702 = sbr.rel (%p700) target = $region40
      $region39: #{tpu_custom_call.1} parent=5 // pred_region
        %s703 = ssub.s32 %s12, 2
        // Predicated region
        $region41: #{tpu_custom_call.1} parent=39 // pred_check
          %p704 = pneg %p109
        $region42: #{tpu_custom_call.1} parent=39 // pred_check_branch
          %706 = sbr.rel (%p704) target = $region44
        $region43: #{tpu_custom_call.1} parent=39 // pred_region
          %s707 = sand.u32 %s94, 1
          %s708 = scalar_lea.sflag [#allocation3], %s707
          %s709 = sand.u32 %s94, 1
          %s710 = smul.addr %s709, 24
          %s711 = scalar_lea.vmem [#allocation2], %s710
          %712 = dma.done %s708, 384
        $region44: #{tpu_custom_call.1} parent=39 // pred_fallthru
          _
      $region40: #{tpu_custom_call.1} parent=5 // pred_fallthru
        _
    $region6: #{tpu_custom_call.1} parent=1 // loop_footer
      %s16 = sadd.s32 1, %s12
    $region7: #{tpu_custom_call.1} parent=1 // loop_footer_branch
      %11 = sbr.rel target = $region3
    $region8: #{tpu_custom_call.1} parent=1 // loop_exit
      _
    %713 = vsyncpa [#allocation3], 1
    %s714 = scalar_lea.sflag [#allocation3], 1
    %715 = vsyncpa %s714, 1

</llo_original>
